<compile_context>
chip_gen: v7x
topology: tpu7x:2x2x1
jax: 0.10.0
libtpu: 0.0.40
codegen_flags: <defaults>
</compile_context>

<pallas_src>
import functools

import numpy as np
import jax
import jax.numpy as jnp
from jax import lax
from jax.experimental import pallas as pl
from jax.experimental.pallas import tpu as pltpu


# ----------------------------------------------------------------------------
# Glue: interpolation weight matrices reproducing PyTorch F.interpolate math.
# ----------------------------------------------------------------------------
def _nearest_matrix(in_size, out_size, scale_factor):
    # PyTorch legacy 'nearest': src = min(floor(dst * scale), in_size - 1) with
    # scale = 1/scale_factor when scale_factor is given (recompute_scale_factor=False),
    # else in_size / out_size.
    if scale_factor is not None and scale_factor > 0:
        scale = 1.0 / float(scale_factor)
    else:
        scale = float(in_size) / float(out_size)
    dst = np.arange(out_size)
    src = np.minimum((dst * scale).astype(np.int64), in_size - 1)
    m = np.zeros((out_size, in_size), np.float32)
    m[dst, src] = 1.0
    return m


def _linear_matrix(in_size, out_size, scale_factor, align_corners):
    m = np.zeros((out_size, in_size), np.float32)
    if out_size == 1:
        m[:, 0] = 1.0
        return m
    dst = np.arange(out_size, dtype=np.float64)
    if align_corners:
        scale = (in_size - 1) / (out_size - 1)
        src = dst * scale
    else:
        if scale_factor is not None and scale_factor > 0:
            scale = 1.0 / float(scale_factor)
        else:
            scale = float(in_size) / float(out_size)
        src = np.maximum((dst + 0.5) * scale - 0.5, 0.0)
    lo = np.clip(np.floor(src).astype(np.int64), 0, in_size - 1)
    hi = lo + (lo < (in_size - 1)).astype(np.int64)
    w_hi = (src - lo).astype(np.float32)
    rows = np.arange(out_size)
    np.add.at(m, (rows, lo), 1.0 - w_hi)
    np.add.at(m, (rows, hi), w_hi)
    return m


def _build_axis_matrix(in_size, out_size, scale_factor, mode, align_corners):
    if mode == "nearest":
        return _nearest_matrix(in_size, out_size, scale_factor)
    elif mode in ("bilinear", "linear"):
        return _linear_matrix(in_size, out_size, scale_factor, bool(align_corners))
    else:
        raise NotImplementedError(f"mode {mode!r} not supported")


@functools.lru_cache(maxsize=None)
def _axis_weights_device(in_size, out_size, scale_factor, mode, align_corners,
                         transpose, dtype_name):
    """Cached host build + device upload of one axis' interpolation matrix."""
    m = _build_axis_matrix(in_size, out_size, scale_factor, mode, align_corners)
    if transpose:
        m = np.ascontiguousarray(m.T)
    return jnp.asarray(m, dtype=jnp.dtype(dtype_name))


# ----------------------------------------------------------------------------
# VMEM-aware channel-block sizing.
# ----------------------------------------------------------------------------
def _round_up(v, m):
    return -(-v // m) * m


def _tile_bytes(rows, cols, itemsize):
    # Conservative (8, 128)-padded VMEM footprint of a 2-D slab.
    return _round_up(rows, 8) * _round_up(cols, 128) * itemsize


def _vmem_limit_bytes():
    cap = 64 * 1024 * 1024
    try:
        info = pltpu.get_tpu_info()
        cap = int(getattr(info, "vmem_capacity_bytes", cap))
    except Exception:
        pass
    # ~48 MiB on v7x (64 MiB physical), ~96-100 MiB on v5e/v6e (128 MiB physical).
    return min(int(cap * 0.75), 100 * 1024 * 1024)


def _pick_channel_block(n_planes, h_in, w_in, h_out, w_out, itemsize, vmem_limit):
    per_plane = (2 * _tile_bytes(h_in, w_in, itemsize)      # double-buffered input block
                 + 2 * _tile_bytes(h_out, w_out, itemsize)  # double-buffered output block
                 + _tile_bytes(h_in, w_in, 4)               # compute copy of x
                 + _tile_bytes(h_out, h_in, 4)              # broadcast Wh rows (per plane)
                 + _tile_bytes(h_out, w_in, 4)              # f32 intermediates (either order)
                 + _tile_bytes(h_in, w_out, 4)
                 + _tile_bytes(h_out, w_out, 4))            # f32 result before cast
    budget = int(vmem_limit * 0.7)                          # headroom for compiler scratch
    cb = max(1, budget // max(1, per_plane))
    # keep >= 2 grid steps when possible (pipelining overlap + v7x two-core sharding)
    cb = min(cb, max(1, (n_planes + 1) // 2))
    # prefer a divisor of n_planes (no padding); otherwise pad the plane dim.
    best = 1
    for d in range(cb, 0, -1):
        if n_planes % d == 0:
            best = d
            break
    if 4 * best >= cb:
        return best, 0
    pad = _round_up(n_planes, cb) - n_planes
    return cb, pad


# ----------------------------------------------------------------------------
# Pallas kernel: Cb planes per grid step, two MXU contractions per block.
# ----------------------------------------------------------------------------
def _resize_kernel(wh_ref, x_ref, ww_ref, o_ref, *, h_first):
    cb, h_in, w_in = x_ref.shape
    h_out, w_out = o_ref.shape[1], o_ref.shape[2]
    cdt = wh_ref.dtype

    x = x_ref[...].astype(cdt)          # (Cb, H_in, W_in)
    wh = wh_ref[...]                    # (H_out, H_in)
    ww = ww_ref[...]                    # (W_in, W_out)

    if h_first:
        # H-axis resize as a Cb-batched matmul (narrower side), then the W-axis
        # resize as ONE flattened MXU matmul with M = Cb*H_out.
        whb = jnp.broadcast_to(wh, (cb, h_out, h_in))
        t = lax.dot_general(whb, x, (((2,), (1,)), ((0,), (0,))),
                            preferred_element_type=jnp.float32)      # (Cb, H_out, W_in)
        t2 = t.reshape(cb * h_out, w_in).astype(cdt)
        out = jnp.dot(t2, ww, preferred_element_type=jnp.float32)    # (Cb*H_out, W_out)
        out = out.reshape(cb, h_out, w_out)
    else:
        # W-axis resize as ONE flattened MXU matmul with M = Cb*H_in, then the
        # H-axis resize as a Cb-batched matmul.
        t = jnp.dot(x.reshape(cb * h_in, w_in), ww,
                    preferred_element_type=jnp.float32)               # (Cb*H_in, W_out)
        t3 = t.reshape(cb, h_in, w_out).astype(cdt)
        whb = jnp.broadcast_to(wh, (cb, h_out, h_in))
        out = lax.dot_general(whb, t3, (((2,), (1,)), ((0,), (0,))),
                              preferred_element_type=jnp.float32)     # (Cb, H_out, W_out)

    o_ref[...] = out.astype(o_ref.dtype)


def interpolate2d(x, size=None, scale_factor=None, mode="nearest", align_corners=False):
    """JAX/Pallas equivalent of Interpolate2d.forward (4D NCHW,
    F.interpolate with recompute_scale_factor=False)."""
    assert x.ndim == 4, "expected NCHW input"
    n, c, h_in, w_in = map(int, x.shape)

    if size is not None:
        if isinstance(size, int):
            h_out, w_out = size, size
        else:
            h_out, w_out = int(size[0]), int(size[1])
        sf_h = sf_w = None
    else:
        if isinstance(scale_factor, (tuple, list)):
            sf_h, sf_w = float(scale_factor[0]), float(scale_factor[1])
        else:
            sf_h = sf_w = float(scale_factor)
        h_out = int(np.floor(h_in * sf_h))
        w_out = int(np.floor(w_in * sf_w))

    ac = None if mode == "nearest" else bool(align_corners)
    w_dtype = jnp.bfloat16 if x.dtype == jnp.dtype(jnp.bfloat16) else jnp.float32
    w_name = jnp.dtype(w_dtype).name
    wh = _axis_weights_device(h_in, h_out, sf_h, mode, ac, False, w_name)  # (H_out, H_in)
    ww = _axis_weights_device(w_in, w_out, sf_w, mode, ac, True, w_name)   # (W_in, W_out)

    p = n * c
    x_flat = x.reshape(p, h_in, w_in)

    vmem_limit = _vmem_limit_bytes()
    cb, pad = _pick_channel_block(p, h_in, w_in, h_out, w_out,
                                  x.dtype.itemsize, vmem_limit)
    if pad:
        x_flat = jnp.pad(x_flat, ((0, pad), (0, 0), (0, 0)))
    p_pad = p + pad
    grid = (p_pad // cb,)

    # Put the single big flattened matmul on the wider spatial side.
    h_first = w_out >= w_in

    if h_first:
        flops = 2 * p * h_out * h_in * w_in + 2 * p * h_out * w_in * w_out
    else:
        flops = 2 * p * h_in * w_in * w_out + 2 * p * h_out * h_in * w_out
    bytes_accessed = (p * (h_in * w_in + h_out * w_out) * x.dtype.itemsize
                      + (h_out * h_in + w_in * w_out) * jnp.dtype(w_dtype).itemsize)
    cost = pl.CostEstimate(flops=int(flops), transcendentals=0,
                           bytes_accessed=int(bytes_accessed))

    kernel = functools.partial(_resize_kernel, h_first=h_first)

    out_flat = pl.pallas_call(
        kernel,
        out_shape=jax.ShapeDtypeStruct((p_pad, h_out, w_out), x.dtype),
        grid_spec=pltpu.PrefetchScalarGridSpec(
            num_scalar_prefetch=0,
            grid=grid,
            in_specs=[
                pl.BlockSpec((h_out, h_in), lambda i: (0, 0)),
                pl.BlockSpec((cb, h_in, w_in), lambda i: (i, 0, 0)),
                pl.BlockSpec((w_in, w_out), lambda i: (0, 0)),
            ],
            out_specs=pl.BlockSpec((cb, h_out, w_out), lambda i: (i, 0, 0)),
        ),
        compiler_params=pltpu.CompilerParams(
            dimension_semantics=("parallel",),
            vmem_limit_bytes=int(vmem_limit),
        ),
        cost_estimate=cost,
    )(wh, x_flat, ww)

    if pad:
        out_flat = out_flat[:p]
    return out_flat.reshape(n, c, h_out, w_out)


# ----------------------------------------------------------------------------
# Demo / correctness checks
# ----------------------------------------------------------------------------
def _np_bilinear_ref(x, h_out, w_out):
    """Pure-numpy F.interpolate(mode='bilinear', align_corners=False, size=...) ref."""
    n, c, h_in, w_in = x.shape

    def axis(in_s, out_s):
        src = np.maximum((np.arange(out_s) + 0.5) * (in_s / out_s) - 0.5, 0.0)
        lo = np.clip(np.floor(src).astype(np.int64), 0, in_s - 1)
        hi = np.minimum(lo + 1, in_s - 1)
        w = (src - lo).astype(np.float64)
        return lo, hi, w

    hlo, hhi, hw = axis(h_in, h_out)
    wlo, whi, wwt = axis(w_in, w_out)
    xr = x.astype(np.float64)
    top = xr[:, :, hlo][:, :, :, wlo] * (1 - wwt) + xr[:, :, hlo][:, :, :, whi] * wwt
    bot = xr[:, :, hhi][:, :, :, wlo] * (1 - wwt) + xr[:, :, hhi][:, :, :, whi] * wwt
    out = top * (1 - hw)[None, None, :, None] + bot * hw[None, None, :, None]
    return out.astype(x.dtype)


if __name__ == "__main__":
    key = jax.random.PRNGKey(0)
    x = jax.random.normal(key, (2, 4, 16, 16), dtype=jnp.float32)
    xn = np.asarray(x)

    # 1) Nearest 2x upsample (Interpolate2d default mode).
    y = jax.block_until_ready(interpolate2d(x, scale_factor=2.0, mode="nearest"))
    assert y.shape == (2, 4, 32, 32)
    idx = np.minimum((np.arange(32) * 0.5).astype(np.int64), 15)
    ref_nearest = xn[:, :, idx][:, :, :, idx]
    np.testing.assert_allclose(np.asarray(y), ref_nearest, rtol=1e-6, atol=1e-6)

    # 2) Bilinear upsample to explicit size (BiFpn top-down path: upsample='bilinear').
    yu = jax.block_until_ready(interpolate2d(x, size=(32, 32), mode="bilinear",
                                             align_corners=False))
    assert yu.shape == (2, 4, 32, 32)
    np.testing.assert_allclose(np.asarray(yu), _np_bilinear_ref(xn, 32, 32),
                               rtol=1e-5, atol=1e-5)

    # 3) Bilinear downsample (BiFpn bottom-up path: downsample='bilinear').
    yd = jax.block_until_ready(interpolate2d(x, size=(8, 8), mode="bilinear",
                                             align_corners=False))
    assert yd.shape == (2, 4, 8, 8)
    np.testing.assert_allclose(np.asarray(yd), _np_bilinear_ref(xn, 8, 8),
                               rtol=1e-5, atol=1e-5)

    print("KERNEL_OK")
</pallas_src>

<mosaic_0001>
module attributes {stable_mosaic.version = 11 : i64} {
  func.func @_resize_kernel(%arg0: i32, %arg1: memref<32x16xf32, #tpu.memory_space<vmem>>, %arg2: memref<4x16x16xf32, #tpu.memory_space<vmem>>, %arg3: memref<16x32xf32, #tpu.memory_space<vmem>>, %arg4: memref<4x32x32xf32, #tpu.memory_space<vmem>>) attributes {dimension_semantics = [#tpu.dimension_semantics<parallel>], iteration_bounds = array<i64: 2>, scalar_prefetch = 0 : i64, scratch_operands = 0 : i64, tpu.core_type = #tpu.core_type<tc>, window_params = [{pipeline_mode = #tpu.pipeline_mode<synchronous>, transform_indices = @transform_0, window_bounds = array<i64: 32, 16>}, {transform_indices = @transform_1, window_bounds = array<i64: 4, 16, 16>}, {pipeline_mode = #tpu.pipeline_mode<synchronous>, transform_indices = @transform_2, window_bounds = array<i64: 16, 32>}, {transform_indices = @transform_3, window_bounds = array<i64: 4, 32, 32>}]} {
    %c0 = arith.constant 0 : index
    %c0_0 = arith.constant 0 : index
    %c0_1 = arith.constant 0 : index
    %0 = vector.load %arg2[%c0, %c0_0, %c0_1] : memref<4x16x16xf32, #tpu.memory_space<vmem>>, vector<4x16x16xf32>
    %c0_2 = arith.constant 0 : index
    %c0_3 = arith.constant 0 : index
    %1 = vector.load %arg1[%c0_2, %c0_3] : memref<32x16xf32, #tpu.memory_space<vmem>>, vector<32x16xf32>
    %c0_4 = arith.constant 0 : index
    %c0_5 = arith.constant 0 : index
    %2 = vector.load %arg3[%c0_4, %c0_5] : memref<16x32xf32, #tpu.memory_space<vmem>>, vector<16x32xf32>
    %3 = vector.shape_cast %1 : vector<32x16xf32> to vector<1x32x16xf32>
    %4 = vector.broadcast %3 : vector<1x32x16xf32> to vector<4x32x16xf32>
    %cst = arith.constant dense<0.000000e+00> : vector<4x32x16xf32>
    %5 = tpu.matmul %4, %0, %cst {dimension_numbers = #tpu.dot_dimension_numbers<[2], [1], [1], [2], [0, 0, 0, 1, 1, 2], [0], [0]>} : vector<4x32x16xf32>, vector<4x16x16xf32>, vector<4x32x16xf32> -> vector<4x32x16xf32>
    %6 = vector.shape_cast %5 : vector<4x32x16xf32> to vector<128x16xf32>
    %cst_6 = arith.constant dense<0.000000e+00> : vector<128x32xf32>
    %7 = tpu.matmul %6, %2, %cst_6 {dimension_numbers = #tpu.dot_dimension_numbers<[1], [0], [0], [1], [0, 0, 1, 1], [], []>} : vector<128x16xf32>, vector<16x32xf32>, vector<128x32xf32> -> vector<128x32xf32>
    %8 = vector.shape_cast %7 : vector<128x32xf32> to vector<4x32x32xf32>
    %c0_7 = arith.constant 0 : index
    %c0_8 = arith.constant 0 : index
    %c0_9 = arith.constant 0 : index
    %9 = vector.load %arg4[%c0_7, %c0_8, %c0_9] : memref<4x32x32xf32, #tpu.memory_space<vmem>>, vector<4x32x32xf32>
    tpu.vector_store %arg4[%c0_7, %c0_8, %c0_9], %8 {strides = array<i32>} : memref<4x32x32xf32, #tpu.memory_space<vmem>>, vector<4x32x32xf32>,
    return
  }
  func.func @transform_0(%arg0: i32) -> (i32, i32) {
    %c0_i32 = arith.constant 0 : i32
    %c0_i32_0 = arith.constant 0 : i32
    %c0_i32_1 = arith.constant 0 : i32
    return %c0_i32, %c0_i32_0 : i32, i32
  }
  func.func @transform_1(%arg0: i32) -> (i32, i32, i32) {
    %c0_i32 = arith.constant 0 : i32
    %c0_i32_0 = arith.constant 0 : i32
    %c0_i32_1 = arith.constant 0 : i32
    return %arg0, %c0_i32, %c0_i32_0 : i32, i32, i32
  }
  func.func @transform_2(%arg0: i32) -> (i32, i32) {
    %c0_i32 = arith.constant 0 : i32
    %c0_i32_0 = arith.constant 0 : i32
    %c0_i32_1 = arith.constant 0 : i32
    return %c0_i32, %c0_i32_0 : i32, i32
  }
  func.func @transform_3(%arg0: i32) -> (i32, i32, i32) {
    %c0_i32 = arith.constant 0 : i32
    %c0_i32_0 = arith.constant 0 : i32
    %c0_i32_1 = arith.constant 0 : i32
    return %arg0, %c0_i32, %c0_i32_0 : i32, i32, i32
  }
}

</mosaic_0001>

<llo_original>
// kernel: tpu_custom_call.1
$region0: #{tpu_custom_call.1}
  #allocation0 [shape = 'u32[]', space=smem, size = 0x4, offset = 0x4, fixed_abs, tag = 'smem constant byte address 0x4 - core index']
  #allocation1 [shape = 'u32[144,128]{1,0:T(1,128)}', space=vmem, size = 0x12000, scoped, tag = 'internal scratch']
  %s0 = inlined_call_operand.vmem [shape: f32[32,16], index: 0, kind: input, shape index: {}]
  %s1 = inlined_call_operand.hbm [shape: f32[8,16,16], index: 1, kind: input, shape index: {}]
  %s2 = inlined_call_operand.vmem [shape: f32[16,32], index: 2, kind: input, shape index: {}]
  %s3 = inlined_call_operand.hbm [shape: f32[8,32,32], index: 3, kind: output, shape index: {}]
  %s4 = sld [smem:[#allocation0]]
  $region49: #{tpu_custom_call.1} parent=0
    _
  %s6 = ssub.s32 1, %s4
  %s7 = scalar_select 0, %s6, %s4
  $region1: #{tpu_custom_call.1} parent=0
    #allocation2 [shape = 'u8[65536]{0}', space=vmem, size = 0x10000, scoped, tag = 'input window, operand 1']
    #allocation3 [shape = 's32[2]{0}', space=sflag, size = 0x8, scoped, tag = 'scoped memory for tpu_custom_call.1']
    #allocation4 [shape = 's32[2]{0}', space=sflag, size = 0x8, scoped, tag = 'scoped memory for tpu_custom_call.1']
    #allocation5 [shape = 'u8[131072]{0}', space=vmem, size = 0x20000, scoped, tag = 'output window, operand 0']
    %8 = vsyncpa [#allocation3], 0
    %s9 = scalar_lea.sflag [#allocation3], 1
    %10 = vsyncpa %s9, 0
    %11 = vsyncpa [#allocation4], 0
    %s12 = scalar_lea.sflag [#allocation4], 1
    %13 = vsyncpa %s12, 0
    loop: start=0, step=1, limit=4
    $region2: #{tpu_custom_call.1} parent=1 // loop_pre_header
      _
    $region3: #{tpu_custom_call.1} parent=1 // loop_header
      %s15 = sphi 0, %s19
      %p16 = scmp.ge.s32.totalorder %s15, 4
      %s23 = sphi 0, %s23
      %s25 = sphi 0, %s23
      %s26 = sphi 0, %s25
      %s40 = sphi 0, %s26
      %s46 = sphi 0, %s48
      %s49 = sphi 0, %s46
      %s50 = sphi 0, %s49
      %s66 = sphi 0, %s50
      %s70 = sphi 0, %s70
      %s72 = sphi 0, %s70
      %s73 = sphi 0, %s72
      %s87 = sphi 0, %s73
      %s93 = sphi 0, %s95
      %s96 = sphi 0, %s93
      %s97 = sphi 0, %s96
      %s113 = sphi 0, %s97
    $region4: #{tpu_custom_call.1} parent=1 // loop_header_branch
      %18 = sbr.rel (%p16) target = $region8
    $region5: #{tpu_custom_call.1} parent=1 // loop_body
      %s20 = ssub.s32 %s15, 1
      %s21 = ssub.s32 %s15, 2
      %s22 = sadd.s32 %s15, 1
      %s24 = sadd.s32 %s23, 1
      %p27 = scmp.eq.s32.totalorder %s15, 1
      %p28 = scmp.ne.s32.totalorder %s23, %s25
      %p29 = scmp.eq.s32.totalorder %s15, 0
      %p30 = por %p28, %p29
      %p31 = scmp.ne.s32.totalorder %s23, %s25
      %p32 = scmp.eq.s32.totalorder %s20, 1
      %p33 = por %p31, %p32
      %p34 = scmp.ne.s32.totalorder %s25, %s26
      %p35 = scmp.eq.s32.totalorder %s20, 0
      %p36 = por %p34, %p35
      %p37 = scmp.ne.s32.totalorder %s25, %s26
      %p38 = scmp.eq.s32.totalorder %s21, 1
      %p39 = por %p37, %p38
      %p41 = scmp.ne.s32.totalorder %s26, %s40
      %p42 = scmp.eq.s32.totalorder %s21, 0
      %p43 = por %p41, %p42
      %s44 = ssub.s32 %s15, %s22
      %p45 = scmp.eq.s32.totalorder %s44, 0
      %s47 = sadd.s32 %s46, 1
      %s48 = scalar_select %p45, %s46, %s47
      %p51 = pneg %p45
      %p52 = scmp.eq.s32.totalorder %s15, 1
      %p53 = por %p51, %p52
      %p54 = scmp.ne.s32.totalorder %s46, %s49
      %p55 = scmp.eq.s32.totalorder %s15, 0
      %p56 = por %p54, %p55
      %p57 = scmp.ne.s32.totalorder %s46, %s49
      %p58 = scmp.eq.s32.totalorder %s20, 1
      %p59 = por %p57, %p58
      %p60 = scmp.ne.s32.totalorder %s49, %s50
      %p61 = scmp.eq.s32.totalorder %s20, 0
      %p62 = por %p60, %p61
      %p63 = scmp.ne.s32.totalorder %s49, %s50
      %p64 = scmp.eq.s32.totalorder %s21, 1
      %p65 = por %p63, %p64
      %p67 = scmp.ne.s32.totalorder %s50, %s66
      %p68 = scmp.eq.s32.totalorder %s21, 0
      %p69 = por %p67, %p68
      %s71 = sadd.s32 %s70, 1
      %p74 = scmp.eq.s32.totalorder %s15, 1
      %p75 = scmp.ne.s32.totalorder %s70, %s72
      %p76 = scmp.eq.s32.totalorder %s15, 0
      %p77 = por %p75, %p76
      %p78 = scmp.ne.s32.totalorder %s70, %s72
      %p79 = scmp.eq.s32.totalorder %s20, 1
      %p80 = por %p78, %p79
      %p81 = scmp.ne.s32.totalorder %s72, %s73
      %p82 = scmp.eq.s32.totalorder %s20, 0
      %p83 = por %p81, %p82
      %p84 = scmp.ne.s32.totalorder %s72, %s73
      %p85 = scmp.eq.s32.totalorder %s21, 1
      %p86 = por %p84, %p85
      %p88 = scmp.ne.s32.totalorder %s73, %s87
      %p89 = scmp.eq.s32.totalorder %s21, 0
      %p90 = por %p88, %p89
      %s91 = ssub.s32 %s15, %s22
      %p92 = scmp.eq.s32.totalorder %s91, 0
      %s94 = sadd.s32 %s93, 1
      %s95 = scalar_select %p92, %s93, %s94
      %p98 = pneg %p92
      %p99 = scmp.eq.s32.totalorder %s15, 1
      %p100 = por %p98, %p99
      %p101 = scmp.ne.s32.totalorder %s93, %s96
      %p102 = scmp.eq.s32.totalorder %s15, 0
      %p103 = por %p101, %p102
      %p104 = scmp.ne.s32.totalorder %s93, %s96
      %p105 = scmp.eq.s32.totalorder %s20, 1
      %p106 = por %p104, %p105
      %p107 = scmp.ne.s32.totalorder %s96, %s97
      %p108 = scmp.eq.s32.totalorder %s20, 0
      %p109 = por %p107, %p108
      %p110 = scmp.ne.s32.totalorder %s96, %s97
      %p111 = scmp.eq.s32.totalorder %s21, 1
      %p112 = por %p110, %p111
      %p114 = scmp.ne.s32.totalorder %s97, %s113
      %p115 = scmp.eq.s32.totalorder %s21, 0
      %p116 = por %p114, %p115
      %p117 = scmp.le.s32.totalorder 1, %s15
      %p118 = scmp.lt.s32.totalorder %s15, 3
      %p119 = pnand %p117, %p118
      %p120 = pneg %p119
      // Predicated region
      $region9: #{tpu_custom_call.1} parent=5 // pred_check
        _
      $region10: #{tpu_custom_call.1} parent=5 // pred_check_branch
        %122 = sbr.rel (%p119) target = $region12
      $region11: #{tpu_custom_call.1} parent=5 // pred_region
        %s123 = ssub.s32 %s15, 1
        // Predicated region
        $region13: #{tpu_custom_call.1} parent=11 // pred_check
          %p124 = pneg %p36
        $region14: #{tpu_custom_call.1} parent=11 // pred_check_branch
          %126 = sbr.rel (%p124) target = $region16
        $region15: #{tpu_custom_call.1} parent=11 // pred_region
          _
        $region16: #{tpu_custom_call.1} parent=11 // pred_fallthru
          _
        // Predicated region
        $region17: #{tpu_custom_call.1} parent=11 // pred_check
          %p127 = pneg %p83
        $region18: #{tpu_custom_call.1} parent=11 // pred_check_branch
          %129 = sbr.rel (%p127) target = $region20
        $region19: #{tpu_custom_call.1} parent=11 // pred_region
          _
        $region20: #{tpu_custom_call.1} parent=11 // pred_fallthru
          _
      $region12: #{tpu_custom_call.1} parent=5 // pred_fallthru
        _
      %p130 = scmp.lt.s32.totalorder %s15, 2
      // Predicated region
      $region21: #{tpu_custom_call.1} parent=5 // pred_check
        %p131 = pneg %p130
      $region22: #{tpu_custom_call.1} parent=5 // pred_check_branch
        %133 = sbr.rel (%p131) target = $region24
      $region23: #{tpu_custom_call.1} parent=5 // pred_region
        // Predicated region
        $region25: #{tpu_custom_call.1} parent=23 // pred_check
          %p134 = pneg %p56
        $region26: #{tpu_custom_call.1} parent=23 // pred_check_branch
          %136 = sbr.rel (%p134) target = $region28
        $region27: #{tpu_custom_call.1} parent=23 // pred_region
          %s137 = sand.u32 %s46, 1
          %s138 = scalar_lea.sflag [#allocation3], %s137
          %s139 = sand.u32 %s46, 1
          %s140 = smul.addr %s139, 64
          %s141 = scalar_lea.vmem [#allocation2], %s140
          %s142 = smul.u32 4, %s15
          %s144 = ssub.s32 1024, 1024
          %145 = vsyncadd %s138, %s144
          %s146 = smul.addr %s142, 2
          %s147 = smul.addr %s146, 128
          %s148 = scalar_lea.hbm %s1, %s147
          %s149 = sshll.u32 %s141, 4
          %s150 = int_to_ptr.vmem [resolvable:$true] %s149
          %155 = dma.hbm_to_vmem [thread:$0]  %s148, 1024, %s150, %s138, 128, 128, 8
        $region28: #{tpu_custom_call.1} parent=23 // pred_fallthru
          _
      $region24: #{tpu_custom_call.1} parent=5 // pred_fallthru
        _
      %p156 = scmp.le.s32.totalorder 1, %s15
      %p157 = scmp.lt.s32.totalorder %s15, 3
      %p158 = pnand %p156, %p157
      %p159 = pneg %p158
      // Predicated region
      $region29: #{tpu_custom_call.1} parent=5 // pred_check
        _
      $region30: #{tpu_custom_call.1} parent=5 // pred_check_branch
        %161 = sbr.rel (%p158) target = $region32
      $region31: #{tpu_custom_call.1} parent=5 // pred_region
        %s162 = ssub.s32 %s15, 1
        %s163 = sand.u32 %s49, 1
        %s164 = scalar_lea.sflag [#allocation3], %s163
        %s165 = sand.u32 %s49, 1
        %s166 = smul.addr %s165, 64
        %s167 = scalar_lea.vmem [#allocation2], %s166
        // Predicated region
        $region33: #{tpu_custom_call.1} parent=31 // pred_check
          %p168 = pneg %p62
        $region34: #{tpu_custom_call.1} parent=31 // pred_check_branch
          %170 = sbr.rel (%p168) target = $region36
        $region35: #{tpu_custom_call.1} parent=31 // pred_region
          %171 = dma.done %s164, 1024
        $region36: #{tpu_custom_call.1} parent=31 // pred_fallthru
          _
        %p172 = pneg %p36
        %p173 = pneg %p33
        %s174 = sand.u32 %s49, 1
        %s175 = scalar_lea.sflag [#allocation3], %s174
        %s176 = sand.u32 %s49, 1
        %s177 = smul.addr %s176, 64
        %s178 = scalar_lea.vmem [#allocation2], %s177
        %p179 = pneg %p62
        %p180 = pneg %p59
        %p181 = pneg %p83
        %p182 = pneg %p80
        %p183 = pneg %p109
        %p184 = pneg %p106
        %s185 = sand.u32 %s96, 1
        %s186 = scalar_lea.sflag [#allocation4], %s185
        %s187 = sand.u32 %s96, 1
        %s188 = smul.addr %s187, 128
        %s189 = scalar_lea.vmem [#allocation5], %s188
        %s190 = smul.u32 4, %s20
        %s191 = smul.u32 4, %s20
        %v192 = vld [vmem:[%s167] sm:$0xff]
        %v193 = vld [vmem:[%s167 + $0x8] sm:$0xff]
        %v194 = vld [vmem:[%s167 + $0x10] sm:$0xff]
        %v195 = vld [vmem:[%s167 + $0x18] sm:$0xff]
        %v196 = vld [vmem:[%s167 + $0x20] sm:$0xff]
        %v197 = vld [vmem:[%s167 + $0x28] sm:$0xff]
        %v198 = vld [vmem:[%s167 + $0x30] sm:$0xff]
        %v199 = vld [vmem:[%s167 + $0x38] sm:$0xff]
        %v200 = vld [vmem:[%s0] sm:$0xff]
        %v201 = vld [vmem:[%s0 + $0x8] sm:$0xff]
        %v202 = vld [vmem:[%s0 + $0x10] sm:$0xff]
        %v203 = vld [vmem:[%s0 + $0x18] sm:$0xff]
        %v204 = vld [vmem:[%s2] sm:$0xff]
        %v205 = vld [vmem:[%s2 + $0x8] sm:$0xff]
        %vm206 = vcmask 130048
        %v208 = vsel %vm206, %v200, 0
        %v211 = vsel %vm206, %v201, 0
        %v214 = vsel %vm206, %v202, 0
        %v217 = vsel %vm206, %v203, 0
        %219 = vmatprep.subr.mxu0 0.0
        %220 = vmatpush1.msra.mxu0 %v192
        %221 = vmatprep.subr.mxu0 0.0
        %222 = vmatpush1.msra.mxu0 %v193
        %223 = vmatprep.subr.mxu0 0.0
        %224 = vmatpush1.msra.mxu0 0.0
        %225 = vmatprep.subr.mxu0 0.0
        %226 = vmatpush1.msra.mxu0 0.0
        %227 = vmatprep.subr.mxu0 0.0
        %228 = vmatpush1.msra.mxu0 0.0
        %229 = vmatprep.subr.mxu0 0.0
        %230 = vmatpush1.msra.mxu0 0.0
        %231 = vmatprep.subr.mxu0 0.0
        %232 = vmatpush1.msra.mxu0 0.0
        %233 = vmatprep.subr.mxu0 0.0
        %234 = vmatpush1.msra.mxu0 0.0
        %235 = vmatprep.subr.mxu0 0.0
        %236 = vmatpush1.msra.mxu0 0.0
        %237 = vmatprep.subr.mxu0 0.0
        %238 = vmatpush1.msra.mxu0 0.0
        %239 = vmatprep.subr.mxu0 0.0
        %240 = vmatpush1.msra.mxu0 0.0
        %241 = vmatprep.subr.mxu0 0.0
        %242 = vmatpush1.msra.mxu0 0.0
        %243 = vmatprep.subr.mxu0 0.0
        %244 = vmatpush1.msra.mxu0 0.0
        %245 = vmatprep.subr.mxu0 0.0
        %246 = vmatpush1.msra.mxu0 0.0
        %247 = vmatprep.subr.mxu0 0.0
        %248 = vmatpush1.msra.mxu0 0.0
        %249 = vmatprep.subr.mxu0 0.0
        %250 = vmatpush1.msra.mxu0 0.0
        %251 = vmatprep.subr.mxu0 0.0
        %252 = vmatpush1.msra.mxu0 0.0
        %253 = vmatprep.subr.mxu0 0.0
        %254 = vmatpush1.msra.mxu0 0.0
        %255 = vmatprep.subr.mxu0 0.0
        %256 = vmatpush1.msra.mxu0 0.0
        %257 = vmatprep.subr.mxu0 0.0
        %258 = vmatpush1.msra.mxu0 0.0
        %259 = vmatprep.subr.mxu0 0.0
        %260 = vmatpush1.msra.mxu0 0.0
        %261 = vmatprep.subr.mxu0 0.0
        %262 = vmatpush1.msra.mxu0 0.0
        %263 = vmatprep.subr.mxu0 0.0
        %264 = vmatpush1.msra.mxu0 0.0
        %265 = vmatprep.subr.mxu0 0.0
        %266 = vmatpush1.msra.mxu0 0.0
        %267 = vmatprep.subr.mxu0 0.0
        %268 = vmatpush1.msra.mxu0 0.0
        %269 = vmatprep.subr.mxu0 0.0
        %270 = vmatpush1.msra.mxu0 0.0
        %271 = vmatprep.subr.mxu0 0.0
        %272 = vmatpush1.msra.mxu0 0.0
        %273 = vmatprep.subr.mxu0 0.0
        %274 = vmatpush1.msra.mxu0 0.0
        %275 = vmatprep.subr.mxu0 0.0
        %276 = vmatpush1.msra.mxu0 0.0
        %277 = vmatprep.subr.mxu0 0.0
        %278 = vmatpush1.msra.mxu0 0.0
        %279 = vmatprep.subr.mxu0 0.0
        %280 = vmatpush1.msra.mxu0 0.0
        %281 = vmatprep.subr.mxu0 0.0
        %282 = vmatpush1.msra.mxu0 0.0
        %283 = vmatprep.mubr.f32.mxu0 0.0
        %284 = vmatmul.mubr.f32.gmra.mrb[0].mxu0 %v208
        %v285 = vpop.f32.mrb[0].mxu0
        %v286 = vadd.f32 0.0, %v285
        %v287 = vpop.f32.mrb[0].mxu0
        %288 = vmatprep.mubr.f32.mxu0 0.0
        %289 = vmatmul.mubr.f32.gmra.mrb[0].mxu0 %v211
        %v290 = vpop.f32.mrb[0].mxu0
        %v291 = vadd.f32 0.0, %v290
        %v292 = vpop.f32.mrb[0].mxu0
        %293 = vmatprep.mubr.f32.mxu0 0.0
        %294 = vmatmul.mubr.f32.gmra.mrb[0].mxu0 %v214
        %v295 = vpop.f32.mrb[0].mxu0
        %v296 = vadd.f32 0.0, %v295
        %v297 = vpop.f32.mrb[0].mxu0
        %298 = vmatprep.mubr.f32.mxu0 0.0
        %299 = vmatmul.mubr.f32.gmra.mrb[0].mxu0 %v217
        %v300 = vpop.f32.mrb[0].mxu0
        %v301 = vadd.f32 0.0, %v300
        %v302 = vpop.f32.mrb[0].mxu0
        %303 = vdwg.mxu0
        %304 = vmatprep.subr.mxu0 0.0
        %305 = vmatpush1.msra.mxu0 %v194
        %306 = vmatprep.subr.mxu0 0.0
        %307 = vmatpush1.msra.mxu0 %v195
        %308 = vmatprep.subr.mxu0 0.0
        %309 = vmatpush1.msra.mxu0 0.0
        %310 = vmatprep.subr.mxu0 0.0
        %311 = vmatpush1.msra.mxu0 0.0
        %312 = vmatprep.subr.mxu0 0.0
        %313 = vmatpush1.msra.mxu0 0.0
        %314 = vmatprep.subr.mxu0 0.0
        %315 = vmatpush1.msra.mxu0 0.0
        %316 = vmatprep.subr.mxu0 0.0
        %317 = vmatpush1.msra.mxu0 0.0
        %318 = vmatprep.subr.mxu0 0.0
        %319 = vmatpush1.msra.mxu0 0.0
        %320 = vmatprep.subr.mxu0 0.0
        %321 = vmatpush1.msra.mxu0 0.0
        %322 = vmatprep.subr.mxu0 0.0
        %323 = vmatpush1.msra.mxu0 0.0
        %324 = vmatprep.subr.mxu0 0.0
        %325 = vmatpush1.msra.mxu0 0.0
        %326 = vmatprep.subr.mxu0 0.0
        %327 = vmatpush1.msra.mxu0 0.0
        %328 = vmatprep.subr.mxu0 0.0
        %329 = vmatpush1.msra.mxu0 0.0
        %330 = vmatprep.subr.mxu0 0.0
        %331 = vmatpush1.msra.mxu0 0.0
        %332 = vmatprep.subr.mxu0 0.0
        %333 = vmatpush1.msra.mxu0 0.0
        %334 = vmatprep.subr.mxu0 0.0
        %335 = vmatpush1.msra.mxu0 0.0
        %336 = vmatprep.subr.mxu0 0.0
        %337 = vmatpush1.msra.mxu0 0.0
        %338 = vmatprep.subr.mxu0 0.0
        %339 = vmatpush1.msra.mxu0 0.0
        %340 = vmatprep.subr.mxu0 0.0
        %341 = vmatpush1.msra.mxu0 0.0
        %342 = vmatprep.subr.mxu0 0.0
        %343 = vmatpush1.msra.mxu0 0.0
        %344 = vmatprep.subr.mxu0 0.0
        %345 = vmatpush1.msra.mxu0 0.0
        %346 = vmatprep.subr.mxu0 0.0
        %347 = vmatpush1.msra.mxu0 0.0
        %348 = vmatprep.subr.mxu0 0.0
        %349 = vmatpush1.msra.mxu0 0.0
        %350 = vmatprep.subr.mxu0 0.0
        %351 = vmatpush1.msra.mxu0 0.0
        %352 = vmatprep.subr.mxu0 0.0
        %353 = vmatpush1.msra.mxu0 0.0
        %354 = vmatprep.subr.mxu0 0.0
        %355 = vmatpush1.msra.mxu0 0.0
        %356 = vmatprep.subr.mxu0 0.0
        %357 = vmatpush1.msra.mxu0 0.0
        %358 = vmatprep.subr.mxu0 0.0
        %359 = vmatpush1.msra.mxu0 0.0
        %360 = vmatprep.subr.mxu0 0.0
        %361 = vmatpush1.msra.mxu0 0.0
        %362 = vmatprep.subr.mxu0 0.0
        %363 = vmatpush1.msra.mxu0 0.0
        %364 = vmatprep.subr.mxu0 0.0
        %365 = vmatpush1.msra.mxu0 0.0
        %366 = vmatprep.subr.mxu0 0.0
        %367 = vmatpush1.msra.mxu0 0.0
        %368 = vmatprep.mubr.f32.mxu0 0.0
        %369 = vmatmul.mubr.f32.gmra.mrb[0].mxu0 %v208
        %v370 = vpop.f32.mrb[0].mxu0
        %v371 = vadd.f32 0.0, %v370
        %v372 = vpop.f32.mrb[0].mxu0
        %373 = vmatprep.mubr.f32.mxu0 0.0
        %374 = vmatmul.mubr.f32.gmra.mrb[0].mxu0 %v211
        %v375 = vpop.f32.mrb[0].mxu0
        %v376 = vadd.f32 0.0, %v375
        %v377 = vpop.f32.mrb[0].mxu0
        %378 = vmatprep.mubr.f32.mxu0 0.0
        %379 = vmatmul.mubr.f32.gmra.mrb[0].mxu0 %v214
        %v380 = vpop.f32.mrb[0].mxu0
        %v381 = vadd.f32 0.0, %v380
        %v382 = vpop.f32.mrb[0].mxu0
        %383 = vmatprep.mubr.f32.mxu0 0.0
        %384 = vmatmul.mubr.f32.gmra.mrb[0].mxu0 %v217
        %v385 = vpop.f32.mrb[0].mxu0
        %v386 = vadd.f32 0.0, %v385
        %v387 = vpop.f32.mrb[0].mxu0
        %388 = vdwg.mxu0
        %389 = vmatprep.subr.mxu0 0.0
        %390 = vmatpush1.msra.mxu0 %v196
        %391 = vmatprep.subr.mxu0 0.0
        %392 = vmatpush1.msra.mxu0 %v197
        %393 = vmatprep.subr.mxu0 0.0
        %394 = vmatpush1.msra.mxu0 0.0
        %395 = vmatprep.subr.mxu0 0.0
        %396 = vmatpush1.msra.mxu0 0.0
        %397 = vmatprep.subr.mxu0 0.0
        %398 = vmatpush1.msra.mxu0 0.0
        %399 = vmatprep.subr.mxu0 0.0
        %400 = vmatpush1.msra.mxu0 0.0
        %401 = vmatprep.subr.mxu0 0.0
        %402 = vmatpush1.msra.mxu0 0.0
        %403 = vmatprep.subr.mxu0 0.0
        %404 = vmatpush1.msra.mxu0 0.0
        %405 = vmatprep.subr.mxu0 0.0
        %406 = vmatpush1.msra.mxu0 0.0
        %407 = vmatprep.subr.mxu0 0.0
        %408 = vmatpush1.msra.mxu0 0.0
        %409 = vmatprep.subr.mxu0 0.0
        %410 = vmatpush1.msra.mxu0 0.0
        %411 = vmatprep.subr.mxu0 0.0
        %412 = vmatpush1.msra.mxu0 0.0
        %413 = vmatprep.subr.mxu0 0.0
        %414 = vmatpush1.msra.mxu0 0.0
        %415 = vmatprep.subr.mxu0 0.0
        %416 = vmatpush1.msra.mxu0 0.0
        %417 = vmatprep.subr.mxu0 0.0
        %418 = vmatpush1.msra.mxu0 0.0
        %419 = vmatprep.subr.mxu0 0.0
        %420 = vmatpush1.msra.mxu0 0.0
        %421 = vmatprep.subr.mxu0 0.0
        %422 = vmatpush1.msra.mxu0 0.0
        %423 = vmatprep.subr.mxu0 0.0
        %424 = vmatpush1.msra.mxu0 0.0
        %425 = vmatprep.subr.mxu0 0.0
        %426 = vmatpush1.msra.mxu0 0.0
        %427 = vmatprep.subr.mxu0 0.0
        %428 = vmatpush1.msra.mxu0 0.0
        %429 = vmatprep.subr.mxu0 0.0
        %430 = vmatpush1.msra.mxu0 0.0
        %431 = vmatprep.subr.mxu0 0.0
        %432 = vmatpush1.msra.mxu0 0.0
        %433 = vmatprep.subr.mxu0 0.0
        %434 = vmatpush1.msra.mxu0 0.0
        %435 = vmatprep.subr.mxu0 0.0
        %436 = vmatpush1.msra.mxu0 0.0
        %437 = vmatprep.subr.mxu0 0.0
        %438 = vmatpush1.msra.mxu0 0.0
        %439 = vmatprep.subr.mxu0 0.0
        %440 = vmatpush1.msra.mxu0 0.0
        %441 = vmatprep.subr.mxu0 0.0
        %442 = vmatpush1.msra.mxu0 0.0
        %443 = vmatprep.subr.mxu0 0.0
        %444 = vmatpush1.msra.mxu0 0.0
        %445 = vmatprep.subr.mxu0 0.0
        %446 = vmatpush1.msra.mxu0 0.0
        %447 = vmatprep.subr.mxu0 0.0
        %448 = vmatpush1.msra.mxu0 0.0
        %449 = vmatprep.subr.mxu0 0.0
        %450 = vmatpush1.msra.mxu0 0.0
        %451 = vmatprep.subr.mxu0 0.0
        %452 = vmatpush1.msra.mxu0 0.0
        %453 = vmatprep.mubr.f32.mxu0 0.0
        %454 = vmatmul.mubr.f32.gmra.mrb[0].mxu0 %v208
        %v455 = vpop.f32.mrb[0].mxu0
        %v456 = vadd.f32 0.0, %v455
        %v457 = vpop.f32.mrb[0].mxu0
        %458 = vmatprep.mubr.f32.mxu0 0.0
        %459 = vmatmul.mubr.f32.gmra.mrb[0].mxu0 %v211
        %v460 = vpop.f32.mrb[0].mxu0
        %v461 = vadd.f32 0.0, %v460
        %v462 = vpop.f32.mrb[0].mxu0
        %463 = vmatprep.mubr.f32.mxu0 0.0
        %464 = vmatmul.mubr.f32.gmra.mrb[0].mxu0 %v214
        %v465 = vpop.f32.mrb[0].mxu0
        %v466 = vadd.f32 0.0, %v465
        %v467 = vpop.f32.mrb[0].mxu0
        %468 = vmatprep.mubr.f32.mxu0 0.0
        %469 = vmatmul.mubr.f32.gmra.mrb[0].mxu0 %v217
        %v470 = vpop.f32.mrb[0].mxu0
        %v471 = vadd.f32 0.0, %v470
        %v472 = vpop.f32.mrb[0].mxu0
        %473 = vdwg.mxu0
        %474 = vmatprep.subr.mxu0 0.0
        %475 = vmatpush1.msra.mxu0 %v198
        %476 = vmatprep.subr.mxu0 0.0
        %477 = vmatpush1.msra.mxu0 %v199
        %478 = vmatprep.subr.mxu0 0.0
        %479 = vmatpush1.msra.mxu0 0.0
        %480 = vmatprep.subr.mxu0 0.0
        %481 = vmatpush1.msra.mxu0 0.0
        %482 = vmatprep.subr.mxu0 0.0
        %483 = vmatpush1.msra.mxu0 0.0
        %484 = vmatprep.subr.mxu0 0.0
        %485 = vmatpush1.msra.mxu0 0.0
        %486 = vmatprep.subr.mxu0 0.0
        %487 = vmatpush1.msra.mxu0 0.0
        %488 = vmatprep.subr.mxu0 0.0
        %489 = vmatpush1.msra.mxu0 0.0
        %490 = vmatprep.subr.mxu0 0.0
        %491 = vmatpush1.msra.mxu0 0.0
        %492 = vmatprep.subr.mxu0 0.0
        %493 = vmatpush1.msra.mxu0 0.0
        %494 = vmatprep.subr.mxu0 0.0
        %495 = vmatpush1.msra.mxu0 0.0
        %496 = vmatprep.subr.mxu0 0.0
        %497 = vmatpush1.msra.mxu0 0.0
        %498 = vmatprep.subr.mxu0 0.0
        %499 = vmatpush1.msra.mxu0 0.0
        %500 = vmatprep.subr.mxu0 0.0
        %501 = vmatpush1.msra.mxu0 0.0
        %502 = vmatprep.subr.mxu0 0.0
        %503 = vmatpush1.msra.mxu0 0.0
        %504 = vmatprep.subr.mxu0 0.0
        %505 = vmatpush1.msra.mxu0 0.0
        %506 = vmatprep.subr.mxu0 0.0
        %507 = vmatpush1.msra.mxu0 0.0
        %508 = vmatprep.subr.mxu0 0.0
        %509 = vmatpush1.msra.mxu0 0.0
        %510 = vmatprep.subr.mxu0 0.0
        %511 = vmatpush1.msra.mxu0 0.0
        %512 = vmatprep.subr.mxu0 0.0
        %513 = vmatpush1.msra.mxu0 0.0
        %514 = vmatprep.subr.mxu0 0.0
        %515 = vmatpush1.msra.mxu0 0.0
        %516 = vmatprep.subr.mxu0 0.0
        %517 = vmatpush1.msra.mxu0 0.0
        %518 = vmatprep.subr.mxu0 0.0
        %519 = vmatpush1.msra.mxu0 0.0
        %520 = vmatprep.subr.mxu0 0.0
        %521 = vmatpush1.msra.mxu0 0.0
        %522 = vmatprep.subr.mxu0 0.0
        %523 = vmatpush1.msra.mxu0 0.0
        %524 = vmatprep.subr.mxu0 0.0
        %525 = vmatpush1.msra.mxu0 0.0
        %526 = vmatprep.subr.mxu0 0.0
        %527 = vmatpush1.msra.mxu0 0.0
        %528 = vmatprep.subr.mxu0 0.0
        %529 = vmatpush1.msra.mxu0 0.0
        %530 = vmatprep.subr.mxu0 0.0
        %531 = vmatpush1.msra.mxu0 0.0
        %532 = vmatprep.subr.mxu0 0.0
        %533 = vmatpush1.msra.mxu0 0.0
        %534 = vmatprep.subr.mxu0 0.0
        %535 = vmatpush1.msra.mxu0 0.0
        %536 = vmatprep.subr.mxu0 0.0
        %537 = vmatpush1.msra.mxu0 0.0
        %538 = vmatprep.mubr.f32.mxu0 0.0
        %539 = vmatmul.mubr.f32.gmra.mrb[0].mxu0 %v208
        %v540 = vpop.f32.mrb[0].mxu0
        %v541 = vadd.f32 0.0, %v540
        %v542 = vpop.f32.mrb[0].mxu0
        %543 = vmatprep.mubr.f32.mxu0 0.0
        %544 = vmatmul.mubr.f32.gmra.mrb[0].mxu0 %v211
        %v545 = vpop.f32.mrb[0].mxu0
        %v546 = vadd.f32 0.0, %v545
        %v547 = vpop.f32.mrb[0].mxu0
        %548 = vmatprep.mubr.f32.mxu0 0.0
        %549 = vmatmul.mubr.f32.gmra.mrb[0].mxu0 %v214
        %v550 = vpop.f32.mrb[0].mxu0
        %v551 = vadd.f32 0.0, %v550
        %v552 = vpop.f32.mrb[0].mxu0
        %553 = vmatprep.mubr.f32.mxu0 0.0
        %554 = vmatmul.mubr.f32.gmra.mrb[0].mxu0 %v217
        %v555 = vpop.f32.mrb[0].mxu0
        %v556 = vadd.f32 0.0, %v555
        %v557 = vpop.f32.mrb[0].mxu0
        %558 = vdwg.mxu0
        %v560 = vsel %vm206, %v286, 0
        %v563 = vsel %vm206, %v291, 0
        %v566 = vsel %vm206, %v296, 0
        %v569 = vsel %vm206, %v301, 0
        %v572 = vsel %vm206, %v371, 0
        %v575 = vsel %vm206, %v376, 0
        %v578 = vsel %vm206, %v381, 0
        %v581 = vsel %vm206, %v386, 0
        %v584 = vsel %vm206, %v456, 0
        %v587 = vsel %vm206, %v461, 0
        %v590 = vsel %vm206, %v466, 0
        %v593 = vsel %vm206, %v471, 0
        %v596 = vsel %vm206, %v541, 0
        %v599 = vsel %vm206, %v546, 0
        %v602 = vsel %vm206, %v551, 0
        %v605 = vsel %vm206, %v556, 0
        %607 = vmatprep.subr.mxu0 0.0
        %608 = vmatpush1.msra.mxu0 %v204
        %609 = vmatprep.subr.mxu0 0.0
        %610 = vmatpush1.msra.mxu0 %v205
        %611 = vmatprep.subr.mxu0 0.0
        %612 = vmatpush1.msra.mxu0 0.0
        %613 = vmatprep.subr.mxu0 0.0
        %614 = vmatpush1.msra.mxu0 0.0
        %615 = vmatprep.subr.mxu0 0.0
        %616 = vmatpush1.msra.mxu0 0.0
        %617 = vmatprep.subr.mxu0 0.0
        %618 = vmatpush1.msra.mxu0 0.0
        %619 = vmatprep.subr.mxu0 0.0
        %620 = vmatpush1.msra.mxu0 0.0
        %621 = vmatprep.subr.mxu0 0.0
        %622 = vmatpush1.msra.mxu0 0.0
        %623 = vmatprep.subr.mxu0 0.0
        %624 = vmatpush1.msra.mxu0 0.0
        %625 = vmatprep.subr.mxu0 0.0
        %626 = vmatpush1.msra.mxu0 0.0
        %627 = vmatprep.subr.mxu0 0.0
        %628 = vmatpush1.msra.mxu0 0.0
        %629 = vmatprep.subr.mxu0 0.0
        %630 = vmatpush1.msra.mxu0 0.0
        %631 = vmatprep.subr.mxu0 0.0
        %632 = vmatpush1.msra.mxu0 0.0
        %633 = vmatprep.subr.mxu0 0.0
        %634 = vmatpush1.msra.mxu0 0.0
        %635 = vmatprep.subr.mxu0 0.0
        %636 = vmatpush1.msra.mxu0 0.0
        %637 = vmatprep.subr.mxu0 0.0
        %638 = vmatpush1.msra.mxu0 0.0
        %639 = vmatprep.subr.mxu0 0.0
        %640 = vmatpush1.msra.mxu0 0.0
        %641 = vmatprep.subr.mxu0 0.0
        %642 = vmatpush1.msra.mxu0 0.0
        %643 = vmatprep.subr.mxu0 0.0
        %644 = vmatpush1.msra.mxu0 0.0
        %645 = vmatprep.subr.mxu0 0.0
        %646 = vmatpush1.msra.mxu0 0.0
        %647 = vmatprep.subr.mxu0 0.0
        %648 = vmatpush1.msra.mxu0 0.0
        %649 = vmatprep.subr.mxu0 0.0
        %650 = vmatpush1.msra.mxu0 0.0
        %651 = vmatprep.subr.mxu0 0.0
        %652 = vmatpush1.msra.mxu0 0.0
        %653 = vmatprep.subr.mxu0 0.0
        %654 = vmatpush1.msra.mxu0 0.0
        %655 = vmatprep.subr.mxu0 0.0
        %656 = vmatpush1.msra.mxu0 0.0
        %657 = vmatprep.subr.mxu0 0.0
        %658 = vmatpush1.msra.mxu0 0.0
        %659 = vmatprep.subr.mxu0 0.0
        %660 = vmatpush1.msra.mxu0 0.0
        %661 = vmatprep.subr.mxu0 0.0
        %662 = vmatpush1.msra.mxu0 0.0
        %663 = vmatprep.subr.mxu0 0.0
        %664 = vmatpush1.msra.mxu0 0.0
        %665 = vmatprep.subr.mxu0 0.0
        %666 = vmatpush1.msra.mxu0 0.0
        %667 = vmatprep.subr.mxu0 0.0
        %668 = vmatpush1.msra.mxu0 0.0
        %669 = vmatprep.subr.mxu0 0.0
        %670 = vmatpush1.msra.mxu0 0.0
        %671 = vmatprep.mubr.f32.mxu0 0.0
        %672 = vmatmul.mubr.f32.gmra.mrb[0].mxu0 %v560
        %v673 = vpop.f32.mrb[0].mxu0
        %v674 = vadd.f32 0.0, %v673
        %v675 = vpop.f32.mrb[0].mxu0
        %676 = vmatprep.mubr.f32.mxu0 0.0
        %677 = vmatmul.mubr.f32.gmra.mrb[0].mxu0 %v563
        %v678 = vpop.f32.mrb[0].mxu0
        %v679 = vadd.f32 0.0, %v678
        %v680 = vpop.f32.mrb[0].mxu0
        %681 = vmatprep.mubr.f32.mxu0 0.0
        %682 = vmatmul.mubr.f32.gmra.mrb[0].mxu0 %v566
        %v683 = vpop.f32.mrb[0].mxu0
        %v684 = vadd.f32 0.0, %v683
        %v685 = vpop.f32.mrb[0].mxu0
        %686 = vmatprep.mubr.f32.mxu0 0.0
        %687 = vmatmul.mubr.f32.gmra.mrb[0].mxu0 %v569
        %v688 = vpop.f32.mrb[0].mxu0
        %v689 = vadd.f32 0.0, %v688
        %v690 = vpop.f32.mrb[0].mxu0
        %691 = vmatprep.mubr.f32.mxu0 0.0
        %692 = vmatmul.mubr.f32.gmra.mrb[0].mxu0 %v572
        %v693 = vpop.f32.mrb[0].mxu0
        %v694 = vadd.f32 0.0, %v693
        %v695 = vpop.f32.mrb[0].mxu0
        %696 = vmatprep.mubr.f32.mxu0 0.0
        %697 = vmatmul.mubr.f32.gmra.mrb[0].mxu0 %v575
        %v698 = vpop.f32.mrb[0].mxu0
        %v699 = vadd.f32 0.0, %v698
        %v700 = vpop.f32.mrb[0].mxu0
        %701 = vmatprep.mubr.f32.mxu0 0.0
        %702 = vmatmul.mubr.f32.gmra.mrb[0].mxu0 %v578
        %v703 = vpop.f32.mrb[0].mxu0
        %v704 = vadd.f32 0.0, %v703
        %v705 = vpop.f32.mrb[0].mxu0
        %706 = vmatprep.mubr.f32.mxu0 0.0
        %707 = vmatmul.mubr.f32.gmra.mrb[0].mxu0 %v581
        %v708 = vpop.f32.mrb[0].mxu0
        %v709 = vadd.f32 0.0, %v708
        %v710 = vpop.f32.mrb[0].mxu0
        %711 = vmatprep.mubr.f32.mxu0 0.0
        %712 = vmatmul.mubr.f32.gmra.mrb[0].mxu0 %v584
        %v713 = vpop.f32.mrb[0].mxu0
        %v714 = vadd.f32 0.0, %v713
        %v715 = vpop.f32.mrb[0].mxu0
        %716 = vmatprep.mubr.f32.mxu0 0.0
        %717 = vmatmul.mubr.f32.gmra.mrb[0].mxu0 %v587
        %v718 = vpop.f32.mrb[0].mxu0
        %v719 = vadd.f32 0.0, %v718
        %v720 = vpop.f32.mrb[0].mxu0
        %721 = vmatprep.mubr.f32.mxu0 0.0
        %722 = vmatmul.mubr.f32.gmra.mrb[0].mxu0 %v590
        %v723 = vpop.f32.mrb[0].mxu0
        %v724 = vadd.f32 0.0, %v723
        %v725 = vpop.f32.mrb[0].mxu0
        %726 = vmatprep.mubr.f32.mxu0 0.0
        %727 = vmatmul.mubr.f32.gmra.mrb[0].mxu0 %v593
        %v728 = vpop.f32.mrb[0].mxu0
        %v729 = vadd.f32 0.0, %v728
        %v730 = vpop.f32.mrb[0].mxu0
        %731 = vmatprep.mubr.f32.mxu0 0.0
        %732 = vmatmul.mubr.f32.gmra.mrb[0].mxu0 %v596
        %v733 = vpop.f32.mrb[0].mxu0
        %v734 = vadd.f32 0.0, %v733
        %v735 = vpop.f32.mrb[0].mxu0
        %736 = vmatprep.mubr.f32.mxu0 0.0
        %737 = vmatmul.mubr.f32.gmra.mrb[0].mxu0 %v599
        %v738 = vpop.f32.mrb[0].mxu0
        %v739 = vadd.f32 0.0, %v738
        %v740 = vpop.f32.mrb[0].mxu0
        %741 = vmatprep.mubr.f32.mxu0 0.0
        %742 = vmatmul.mubr.f32.gmra.mrb[0].mxu0 %v602
        %v743 = vpop.f32.mrb[0].mxu0
        %v744 = vadd.f32 0.0, %v743
        %v745 = vpop.f32.mrb[0].mxu0
        %746 = vmatprep.mubr.f32.mxu0 0.0
        %747 = vmatmul.mubr.f32.gmra.mrb[0].mxu0 %v605
        %v748 = vpop.f32.mrb[0].mxu0
        %v749 = vadd.f32 0.0, %v748
        %v750 = vpop.f32.mrb[0].mxu0
        %751 = vdwg.mxu0
        %vm752 = vcmask 261120
        %753 = vst.msk [vmem:[%s189] sm:$0xff] %vm752, %v674
        %754 = vst.msk [vmem:[%s189 + $0x8] sm:$0xff] %vm752, %v679
        %755 = vst.msk [vmem:[%s189 + $0x10] sm:$0xff] %vm752, %v684
        %756 = vst.msk [vmem:[%s189 + $0x18] sm:$0xff] %vm752, %v689
        %757 = vst.msk [vmem:[%s189 + $0x20] sm:$0xff] %vm752, %v694
        %758 = vst.msk [vmem:[%s189 + $0x28] sm:$0xff] %vm752, %v699
        %759 = vst.msk [vmem:[%s189 + $0x30] sm:$0xff] %vm752, %v704
        %760 = vst.msk [vmem:[%s189 + $0x38] sm:$0xff] %vm752, %v709
        %761 = vst.msk [vmem:[%s189 + $0x40] sm:$0xff] %vm752, %v714
        %762 = vst.msk [vmem:[%s189 + $0x48] sm:$0xff] %vm752, %v719
        %763 = vst.msk [vmem:[%s189 + $0x50] sm:$0xff] %vm752, %v724
        %764 = vst.msk [vmem:[%s189 + $0x58] sm:$0xff] %vm752, %v729
        %765 = vst.msk [vmem:[%s189 + $0x60] sm:$0xff] %vm752, %v734
        %766 = vst.msk [vmem:[%s189 + $0x68] sm:$0xff] %vm752, %v739
        %767 = vst.msk [vmem:[%s189 + $0x70] sm:$0xff] %vm752, %v744
        %768 = vst.msk [vmem:[%s189 + $0x78] sm:$0xff] %vm752, %v749
        %s769 = sand.u32 %s96, 1
        %s770 = scalar_lea.sflag [#allocation4], %s769
        %s771 = sand.u32 %s96, 1
        %s772 = smul.addr %s771, 128
        %s773 = scalar_lea.vmem [#allocation5], %s772
        // Predicated region
        $region37: #{tpu_custom_call.1} parent=31 // pred_check
          %p774 = pneg %p106
        $region38: #{tpu_custom_call.1} parent=31 // pred_check_branch
          %776 = sbr.rel (%p774) target = $region40
        $region39: #{tpu_custom_call.1} parent=31 // pred_region
          %s777 = smul.u32 4, %s20
          %s779 = ssub.s32 2048, 2048
          %780 = vsyncadd %s770, %s779
          %s781 = smul.addr %s777, 4
          %s782 = smul.addr %s781, 128
          %s783 = scalar_lea.hbm %s3, %s782
          %s784 = sshll.u32 %s773, 4
          %s785 = int_to_ptr.vmem [resolvable:$true] %s784
          %790 = dma.vmem_to_hbm [thread:$0]  %s785, 2048, %s783, %s770, 128, 128, 8
        $region40: #{tpu_custom_call.1} parent=31 // pred_fallthru
          _
      $region32: #{tpu_custom_call.1} parent=5 // pred_fallthru
        _
      %p791 = scmp.le.s32.totalorder 2, %s15
      // Predicated region
      $region41: #{tpu_custom_call.1} parent=5 // pred_check
        %p792 = pneg %p791
      $region42: #{tpu_custom_call.1} parent=5 // pred_check_branch
        %794 = sbr.rel (%p792) target = $region44
      $region43: #{tpu_custom_call.1} parent=5 // pred_region
        %s795 = ssub.s32 %s15, 2
        // Predicated region
        $region45: #{tpu_custom_call.1} parent=43 // pred_check
          %p796 = pneg %p112
        $region46: #{tpu_custom_call.1} parent=43 // pred_check_branch
          %798 = sbr.rel (%p796) target = $region48
        $region47: #{tpu_custom_call.1} parent=43 // pred_region
          %s799 = sand.u32 %s97, 1
          %s800 = scalar_lea.sflag [#allocation4], %s799
          %s801 = sand.u32 %s97, 1
          %s802 = smul.addr %s801, 128
          %s803 = scalar_lea.vmem [#allocation5], %s802
          %804 = dma.done %s800, 2048
        $region48: #{tpu_custom_call.1} parent=43 // pred_fallthru
          _
      $region44: #{tpu_custom_call.1} parent=5 // pred_fallthru
        _
    $region6: #{tpu_custom_call.1} parent=1 // loop_footer
      %s19 = sadd.s32 1, %s15
    $region7: #{tpu_custom_call.1} parent=1 // loop_footer_branch
      %14 = sbr.rel target = $region3
    $region8: #{tpu_custom_call.1} parent=1 // loop_exit
      _
    %805 = vsyncpa [#allocation3], 1
    %s806 = scalar_lea.sflag [#allocation3], 1
    %807 = vsyncpa %s806, 1
    %808 = vsyncpa [#allocation4], 1
    %s809 = scalar_lea.sflag [#allocation4], 1
    %810 = vsyncpa %s809, 1

</llo_original>
